<compile_context>
chip_gen: v7x
topology: tpu7x:2x2x1
jax: 0.10.0
libtpu: 0.0.40
codegen_flags: <defaults>
</compile_context>

<pallas_src>
import functools

import jax
import jax.numpy as jnp
from jax.experimental import pallas as pl
from jax.experimental.pallas import tpu as pltpu


def _automaton_kernel(idx_ref,      # (T,)  int32  SMEM   character indices
                      state0_ref,   # (1,P) f32    VMEM   augmented start state
                      mats_ref,     # (K,P,P) f32  VMEM   augmented transfer mats
                      finals_ref,   # (1,P) f32    VMEM   augmented finals vector
                      out_ref,      # (1,1) f32    VMEM   output = 1 - exp(logp)
                      *, num_steps):
    state = state0_ref[...]                           # (1, P)

    # Fully unrolled recurrence (num_steps is a static Python int).
    for t in range(num_steps):
        k = idx_ref[t]                                # dynamic scalar from SMEM
        m = mats_ref[k]                               # (P, P) resident in VMEM
        # [v, acc] @ [[T_k, p_k], [0, 1]] = [v @ T_k, acc + v @ p_k]
        state = jnp.dot(state, m, preferred_element_type=jnp.float32)

    # p = acc_T + v_T @ finals   (finals_ref = [finals, 1, 0...])
    p = jnp.sum(state * finals_ref[...], axis=-1, keepdims=True)   # (1, 1)
    out_ref[...] = 1.0 - jnp.exp(p)


def automaton_forward(idx, start_prob, start_vector, transfer_matrices,
                      prob_vectors, finals_vector):
    """idx: (T,) int32; start_prob: (1,1) f32; start_vector: (1,S) f32;
    transfer_matrices: (K,S,S) f32; prob_vectors: (K,1,S) f32;
    finals_vector: (1,S) f32.  Returns (1,1) f32 = 1 - exp(log_prob)."""
    T = int(idx.shape[0])
    K, S, _ = transfer_matrices.shape

    # Augmented dimension, padded to a sublane multiple for clean layout.
    P = ((S + 1 + 7) // 8) * 8

    # Augmented transfer matrices: M_k = [[T_k, p_k], [0, 1]], zero-padded.
    mats = jnp.zeros((K, P, P), dtype=jnp.float32)
    mats = mats.at[:, :S, :S].set(transfer_matrices.astype(jnp.float32))
    mats = mats.at[:, :S, S].set(prob_vectors[:, 0, :].astype(jnp.float32))
    mats = mats.at[:, S, S].set(1.0)

    # Augmented start state: [start_vector, start_prob, 0...].
    state0 = jnp.zeros((1, P), dtype=jnp.float32)
    state0 = state0.at[0, :S].set(start_vector[0].astype(jnp.float32))
    state0 = state0.at[0, S].set(start_prob[0, 0].astype(jnp.float32))

    # Augmented finals: [finals_vector, 1, 0...].
    finals = jnp.zeros((1, P), dtype=jnp.float32)
    finals = finals.at[0, :S].set(finals_vector[0].astype(jnp.float32))
    finals = finals.at[0, S].set(1.0)

    # Gate the VMEM-resident table: raise the scoped limit if the table is
    # big (v7x has only 64 MiB physical / 32 MiB default scoped VMEM).
    vmem_needed = int(mats.size + state0.size + finals.size) * 4 + (1 << 20)
    compiler_params = None
    if vmem_needed > (16 << 20):
        compiler_params = pltpu.CompilerParams(
            vmem_limit_bytes=min(vmem_needed, 48 << 20))

    kernel = functools.partial(_automaton_kernel, num_steps=T)

    return pl.pallas_call(
        kernel,
        out_shape=jax.ShapeDtypeStruct((1, 1), jnp.float32),
        in_specs=[
            pl.BlockSpec(memory_space=pltpu.MemorySpace.SMEM),   # idx
            pl.BlockSpec(memory_space=pltpu.MemorySpace.VMEM),   # state0
            pl.BlockSpec(memory_space=pltpu.MemorySpace.VMEM),   # aug matrices
            pl.BlockSpec(memory_space=pltpu.MemorySpace.VMEM),   # aug finals
        ],
        out_specs=pl.BlockSpec(memory_space=pltpu.MemorySpace.VMEM),
        compiler_params=compiler_params,
    )(idx, state0, mats, finals)


def reference_forward(idx, start_prob, start_vector, transfer_matrices,
                      prob_vectors, finals_vector):
    """Plain-JAX mirror of the PyTorch forward (for verification)."""
    v = start_vector[0]          # (S,)
    p = start_prob[0, 0]
    for i in list(idx):
        i = int(i)
        p = p + v @ prob_vectors[i, 0]
        v = v @ transfer_matrices[i]
    p = p + v @ finals_vector[0]
    return 1.0 - jnp.exp(p)


if __name__ == "__main__":
    # --- deterministic synthetic parameters ---------------------------
    S = 16          # number of automaton states
    K = 4           # alphabet size (number of distinct characters)
    conversation = "abcdbaca"   # length-8 sequence
    index_map = {"a": 0, "b": 1, "c": 2, "d": 3}
    idx = jnp.array([index_map[c] for c in conversation], dtype=jnp.int32)

    key = jax.random.PRNGKey(0)
    k1, k2, k3, k4 = jax.random.split(key, 4)

    start_prob = jnp.full((1, 1), -0.1, dtype=jnp.float32)
    start_vector = jax.nn.softmax(
        jax.random.normal(k1, (1, S), dtype=jnp.float32), axis=-1)
    transfer_matrices = jax.nn.softmax(
        jax.random.normal(k2, (K, S, S), dtype=jnp.float32), axis=-1)
    prob_vectors = -0.1 * jnp.abs(
        jax.random.normal(k3, (K, 1, S), dtype=jnp.float32))
    finals_vector = -0.1 * jnp.abs(
        jax.random.normal(k4, (1, S), dtype=jnp.float32))

    # --- run kernel ----------------------------------------------------
    out = automaton_forward(idx, start_prob, start_vector, transfer_matrices,
                            prob_vectors, finals_vector)
    out = jax.block_until_ready(out)

    ref = reference_forward(idx, start_prob, start_vector, transfer_matrices,
                            prob_vectors, finals_vector)

    assert jnp.allclose(out[0, 0], ref, rtol=1e-5, atol=1e-5), (out, ref)
    print("KERNEL_OK")
</pallas_src>

<mosaic_0001>
module attributes {stable_mosaic.version = 11 : i64} {
  func.func @_automaton_kernel(%arg0: memref<8xi32, #tpu.memory_space<smem>>, %arg1: memref<1x24xf32, #tpu.memory_space<vmem>>, %arg2: memref<4x24x24xf32, #tpu.memory_space<vmem>>, %arg3: memref<1x24xf32, #tpu.memory_space<vmem>>, %arg4: memref<1x1xf32, #tpu.memory_space<vmem>>) attributes {dimension_semantics = [], scalar_prefetch = 0 : i64, scratch_operands = 0 : i64, tpu.core_type = #tpu.core_type<tc>} {
    %c0 = arith.constant 0 : index
    %c0_0 = arith.constant 0 : index
    %0 = vector.load %arg1[%c0, %c0_0] : memref<1x24xf32, #tpu.memory_space<vmem>>, vector<1x24xf32>
    %c0_1 = arith.constant 0 : index
    %1 = memref.load %arg0[%c0_1] : memref<8xi32, #tpu.memory_space<smem>>
    %2 = arith.index_cast %1 : i32 to index
    %c0_2 = arith.constant 0 : index
    %c0_3 = arith.constant 0 : index
    %3 = vector.load %arg2[%2, %c0_2, %c0_3] : memref<4x24x24xf32, #tpu.memory_space<vmem>>, vector<1x24x24xf32>
    %4 = vector.shape_cast %3 : vector<1x24x24xf32> to vector<24x24xf32>
    %cst = arith.constant dense<0.000000e+00> : vector<1x24xf32>
    %5 = tpu.matmul %0, %4, %cst {dimension_numbers = #tpu.dot_dimension_numbers<[1], [0], [0], [1], [0, 0, 1, 1], [], []>} : vector<1x24xf32>, vector<24x24xf32>, vector<1x24xf32> -> vector<1x24xf32>
    %c1 = arith.constant 1 : index
    %6 = memref.load %arg0[%c1] : memref<8xi32, #tpu.memory_space<smem>>
    %7 = arith.index_cast %6 : i32 to index
    %c0_4 = arith.constant 0 : index
    %c0_5 = arith.constant 0 : index
    %8 = vector.load %arg2[%7, %c0_4, %c0_5] : memref<4x24x24xf32, #tpu.memory_space<vmem>>, vector<1x24x24xf32>
    %9 = vector.shape_cast %8 : vector<1x24x24xf32> to vector<24x24xf32>
    %cst_6 = arith.constant dense<0.000000e+00> : vector<1x24xf32>
    %10 = tpu.matmul %5, %9, %cst_6 {dimension_numbers = #tpu.dot_dimension_numbers<[1], [0], [0], [1], [0, 0, 1, 1], [], []>} : vector<1x24xf32>, vector<24x24xf32>, vector<1x24xf32> -> vector<1x24xf32>
    %c2 = arith.constant 2 : index
    %11 = memref.load %arg0[%c2] : memref<8xi32, #tpu.memory_space<smem>>
    %12 = arith.index_cast %11 : i32 to index
    %c0_7 = arith.constant 0 : index
    %c0_8 = arith.constant 0 : index
    %13 = vector.load %arg2[%12, %c0_7, %c0_8] : memref<4x24x24xf32, #tpu.memory_space<vmem>>, vector<1x24x24xf32>
    %14 = vector.shape_cast %13 : vector<1x24x24xf32> to vector<24x24xf32>
    %cst_9 = arith.constant dense<0.000000e+00> : vector<1x24xf32>
    %15 = tpu.matmul %10, %14, %cst_9 {dimension_numbers = #tpu.dot_dimension_numbers<[1], [0], [0], [1], [0, 0, 1, 1], [], []>} : vector<1x24xf32>, vector<24x24xf32>, vector<1x24xf32> -> vector<1x24xf32>
    %c3 = arith.constant 3 : index
    %16 = memref.load %arg0[%c3] : memref<8xi32, #tpu.memory_space<smem>>
    %17 = arith.index_cast %16 : i32 to index
    %c0_10 = arith.constant 0 : index
    %c0_11 = arith.constant 0 : index
    %18 = vector.load %arg2[%17, %c0_10, %c0_11] : memref<4x24x24xf32, #tpu.memory_space<vmem>>, vector<1x24x24xf32>
    %19 = vector.shape_cast %18 : vector<1x24x24xf32> to vector<24x24xf32>
    %cst_12 = arith.constant dense<0.000000e+00> : vector<1x24xf32>
    %20 = tpu.matmul %15, %19, %cst_12 {dimension_numbers = #tpu.dot_dimension_numbers<[1], [0], [0], [1], [0, 0, 1, 1], [], []>} : vector<1x24xf32>, vector<24x24xf32>, vector<1x24xf32> -> vector<1x24xf32>
    %c4 = arith.constant 4 : index
    %21 = memref.load %arg0[%c4] : memref<8xi32, #tpu.memory_space<smem>>
    %22 = arith.index_cast %21 : i32 to index
    %c0_13 = arith.constant 0 : index
    %c0_14 = arith.constant 0 : index
    %23 = vector.load %arg2[%22, %c0_13, %c0_14] : memref<4x24x24xf32, #tpu.memory_space<vmem>>, vector<1x24x24xf32>
    %24 = vector.shape_cast %23 : vector<1x24x24xf32> to vector<24x24xf32>
    %cst_15 = arith.constant dense<0.000000e+00> : vector<1x24xf32>
    %25 = tpu.matmul %20, %24, %cst_15 {dimension_numbers = #tpu.dot_dimension_numbers<[1], [0], [0], [1], [0, 0, 1, 1], [], []>} : vector<1x24xf32>, vector<24x24xf32>, vector<1x24xf32> -> vector<1x24xf32>
    %c5 = arith.constant 5 : index
    %26 = memref.load %arg0[%c5] : memref<8xi32, #tpu.memory_space<smem>>
    %27 = arith.index_cast %26 : i32 to index
    %c0_16 = arith.constant 0 : index
    %c0_17 = arith.constant 0 : index
    %28 = vector.load %arg2[%27, %c0_16, %c0_17] : memref<4x24x24xf32, #tpu.memory_space<vmem>>, vector<1x24x24xf32>
    %29 = vector.shape_cast %28 : vector<1x24x24xf32> to vector<24x24xf32>
    %cst_18 = arith.constant dense<0.000000e+00> : vector<1x24xf32>
    %30 = tpu.matmul %25, %29, %cst_18 {dimension_numbers = #tpu.dot_dimension_numbers<[1], [0], [0], [1], [0, 0, 1, 1], [], []>} : vector<1x24xf32>, vector<24x24xf32>, vector<1x24xf32> -> vector<1x24xf32>
    %c6 = arith.constant 6 : index
    %31 = memref.load %arg0[%c6] : memref<8xi32, #tpu.memory_space<smem>>
    %32 = arith.index_cast %31 : i32 to index
    %c0_19 = arith.constant 0 : index
    %c0_20 = arith.constant 0 : index
    %33 = vector.load %arg2[%32, %c0_19, %c0_20] : memref<4x24x24xf32, #tpu.memory_space<vmem>>, vector<1x24x24xf32>
    %34 = vector.shape_cast %33 : vector<1x24x24xf32> to vector<24x24xf32>
    %cst_21 = arith.constant dense<0.000000e+00> : vector<1x24xf32>
    %35 = tpu.matmul %30, %34, %cst_21 {dimension_numbers = #tpu.dot_dimension_numbers<[1], [0], [0], [1], [0, 0, 1, 1], [], []>} : vector<1x24xf32>, vector<24x24xf32>, vector<1x24xf32> -> vector<1x24xf32>
    %c7 = arith.constant 7 : index
    %36 = memref.load %arg0[%c7] : memref<8xi32, #tpu.memory_space<smem>>
    %37 = arith.index_cast %36 : i32 to index
    %c0_22 = arith.constant 0 : index
    %c0_23 = arith.constant 0 : index
    %38 = vector.load %arg2[%37, %c0_22, %c0_23] : memref<4x24x24xf32, #tpu.memory_space<vmem>>, vector<1x24x24xf32>
    %39 = vector.shape_cast %38 : vector<1x24x24xf32> to vector<24x24xf32>
    %cst_24 = arith.constant dense<0.000000e+00> : vector<1x24xf32>
    %40 = tpu.matmul %35, %39, %cst_24 {dimension_numbers = #tpu.dot_dimension_numbers<[1], [0], [0], [1], [0, 0, 1, 1], [], []>} : vector<1x24xf32>, vector<24x24xf32>, vector<1x24xf32> -> vector<1x24xf32>
    %c0_25 = arith.constant 0 : index
    %c0_26 = arith.constant 0 : index
    %41 = vector.load %arg3[%c0_25, %c0_26] : memref<1x24xf32, #tpu.memory_space<vmem>>, vector<1x24xf32>
    %42 = arith.mulf %40, %41 : vector<1x24xf32>
    %cst_27 = arith.constant dense<0.000000e+00> : vector<1xf32>
    %43 = vector.multi_reduction <add>, %42, %cst_27 [1] : vector<1x24xf32> to vector<1xf32>
    %44 = vector.shape_cast %43 : vector<1xf32> to vector<1x1xf32>
    %45 = math.exp %44 : vector<1x1xf32>
    %cst_28 = arith.constant 1.000000e+00 : f32
    %46 = vector.broadcast %cst_28 : f32 to vector<1x1xf32>
    %47 = arith.subf %46, %45 : vector<1x1xf32>
    %c0_29 = arith.constant 0 : index
    %c0_30 = arith.constant 0 : index
    %48 = vector.load %arg4[%c0_29, %c0_30] : memref<1x1xf32, #tpu.memory_space<vmem>>, vector<1x1xf32>
    tpu.vector_store %arg4[%c0_29, %c0_30], %47 {strides = array<i32>} : memref<1x1xf32, #tpu.memory_space<vmem>>, vector<1x1xf32>,
    return
  }
}

</mosaic_0001>

<llo_original>
// kernel: tpu_custom_call.1
$region0: #{tpu_custom_call.1}
  #allocation0 [shape = 'u32[]', space=smem, size = 0x4, offset = 0x4, fixed_abs, tag = 'smem constant byte address 0x4 - core index']
  #allocation1 [shape = 'u32[144,128]{1,0:T(1,128)}', space=vmem, size = 0x12000, scoped, tag = 'internal scratch']
  %s0 = inlined_call_operand.hbm [shape: s32[8], index: 0, kind: input, shape index: {}]
  %s1 = inlined_call_operand.vmem [shape: f32[1,24], index: 1, kind: input, shape index: {}]
  %s2 = inlined_call_operand.hbm [shape: f32[4,24,24], index: 2, kind: input, shape index: {}]
  %s3 = inlined_call_operand.vmem [shape: f32[1,24], index: 3, kind: input, shape index: {}]
  %s4 = inlined_call_operand.hbm [shape: f32[1,1], index: 4, kind: output, shape index: {}]
  %s5 = sld [smem:[#allocation0]]
  $region34: #{tpu_custom_call.1} parent=0
    _
  %s7 = ssub.s32 1, %s5
  %s8 = scalar_select 0, %s7, %s5
  $region1: #{tpu_custom_call.1} parent=0
    #allocation2 [shape = 'u8[512]{0}', space=smem, size = 0x200, scoped, tag = 'input window, operand 0, single buffered']
    #allocation3 [shape = 's32[1]{0}', space=sflag, size = 0x4, scoped, tag = 'scoped memory for tpu_custom_call.1']
    #allocation4 [shape = 's32[1]{0}', space=sflag, size = 0x4, scoped, tag = 'scoped memory for tpu_custom_call.1']
    #allocation5 [shape = 's32[1]{0}', space=sflag, size = 0x4, scoped, tag = 'scoped memory for tpu_custom_call.1']
    #allocation6 [shape = 'u8[49152]{0}', space=vmem, size = 0xc000, scoped, tag = 'input window, operand 2, single buffered']
    #allocation7 [shape = 'u8[512]{0}', space=vmem, size = 0x400, scoped, tag = 'output window, operand 0, single buffered']
    %9 = vsyncpa [#allocation5], 0
    %10 = vsyncpa [#allocation3], 0
    %11 = vsyncpa [#allocation4], 0
    // Predicated region
    $region2: #{tpu_custom_call.1} parent=1 // pred_check
      _
    $region3: #{tpu_custom_call.1} parent=1 // pred_check_branch
      %13 = sbr.rel (0) target = $region5
    $region4: #{tpu_custom_call.1} parent=1 // pred_region
      %s15 = ssub.s32 16, 16
      %16 = vsyncadd [#allocation5], %s15
      %19 = dma.hbm_to_smem %s0, 16, [#allocation2], [#allocation5]
    $region5: #{tpu_custom_call.1} parent=1 // pred_fallthru
      _
    // Predicated region
    $region6: #{tpu_custom_call.1} parent=1 // pred_check
      _
    $region7: #{tpu_custom_call.1} parent=1 // pred_check_branch
      %21 = sbr.rel (0) target = $region9
    $region8: #{tpu_custom_call.1} parent=1 // pred_region
      _
    $region9: #{tpu_custom_call.1} parent=1 // pred_fallthru
      _
    // Predicated region
    $region10: #{tpu_custom_call.1} parent=1 // pred_check
      _
    $region11: #{tpu_custom_call.1} parent=1 // pred_check_branch
      %23 = sbr.rel (0) target = $region13
    $region12: #{tpu_custom_call.1} parent=1 // pred_region
      %s25 = ssub.s32 1536, 1536
      %26 = vsyncadd [#allocation3], %s25
      %s27 = sshll.u32 [#allocation6], 4
      %s28 = int_to_ptr.vmem [resolvable:$true] %s27
      %33 = dma.hbm_to_vmem [thread:$0]  %s2, 1536, %s28, [#allocation3], 128, 128, 8
    $region13: #{tpu_custom_call.1} parent=1 // pred_fallthru
      _
    // Predicated region
    $region14: #{tpu_custom_call.1} parent=1 // pred_check
      _
    $region15: #{tpu_custom_call.1} parent=1 // pred_check_branch
      %35 = sbr.rel (0) target = $region17
    $region16: #{tpu_custom_call.1} parent=1 // pred_region
      _
    $region17: #{tpu_custom_call.1} parent=1 // pred_fallthru
      _
    // Predicated region
    $region18: #{tpu_custom_call.1} parent=1 // pred_check
      _
    $region19: #{tpu_custom_call.1} parent=1 // pred_check_branch
      %37 = sbr.rel (0) target = $region21
    $region20: #{tpu_custom_call.1} parent=1 // pred_region
      %38 = dma.done [#allocation5], 16
    $region21: #{tpu_custom_call.1} parent=1 // pred_fallthru
      _
    // Predicated region
    $region22: #{tpu_custom_call.1} parent=1 // pred_check
      _
    $region23: #{tpu_custom_call.1} parent=1 // pred_check_branch
      %40 = sbr.rel (0) target = $region25
    $region24: #{tpu_custom_call.1} parent=1 // pred_region
      %41 = dma.done [#allocation3], 1536
    $region25: #{tpu_custom_call.1} parent=1 // pred_fallthru
      _
    %42 = sfence
    %v43 = vld [vmem:[%s1] sm:$0x1]
    %s44 = sld [smem:[#allocation2]]
    %s45 = smul.u32 %s44, 24
    %s46 = scalar_lea.vmem [#allocation6], %s45
    %v47 = vld [vmem:[%s46] sm:$0xff]
    %v48 = vld [vmem:[%s46 + $0x8] sm:$0xff]
    %v49 = vld [vmem:[%s46 + $0x10] sm:$0xff]
    %vm50 = vcmask 195584
    %v52 = vsel %vm50, %v43, 0
    %54 = vmatprep.subr.mxu0 0.0
    %55 = vmatpush1.msra.mxu0 %v47
    %56 = vmatprep.subr.mxu0 0.0
    %57 = vmatpush1.msra.mxu0 %v48
    %58 = vmatprep.subr.mxu0 0.0
    %59 = vmatpush1.msra.mxu0 %v49
    %60 = vmatprep.subr.mxu0 0.0
    %61 = vmatpush1.msra.mxu0 0.0
    %62 = vmatprep.subr.mxu0 0.0
    %63 = vmatpush1.msra.mxu0 0.0
    %64 = vmatprep.subr.mxu0 0.0
    %65 = vmatpush1.msra.mxu0 0.0
    %66 = vmatprep.subr.mxu0 0.0
    %67 = vmatpush1.msra.mxu0 0.0
    %68 = vmatprep.subr.mxu0 0.0
    %69 = vmatpush1.msra.mxu0 0.0
    %70 = vmatprep.subr.mxu0 0.0
    %71 = vmatpush1.msra.mxu0 0.0
    %72 = vmatprep.subr.mxu0 0.0
    %73 = vmatpush1.msra.mxu0 0.0
    %74 = vmatprep.subr.mxu0 0.0
    %75 = vmatpush1.msra.mxu0 0.0
    %76 = vmatprep.subr.mxu0 0.0
    %77 = vmatpush1.msra.mxu0 0.0
    %78 = vmatprep.subr.mxu0 0.0
    %79 = vmatpush1.msra.mxu0 0.0
    %80 = vmatprep.subr.mxu0 0.0
    %81 = vmatpush1.msra.mxu0 0.0
    %82 = vmatprep.subr.mxu0 0.0
    %83 = vmatpush1.msra.mxu0 0.0
    %84 = vmatprep.subr.mxu0 0.0
    %85 = vmatpush1.msra.mxu0 0.0
    %86 = vmatprep.subr.mxu0 0.0
    %87 = vmatpush1.msra.mxu0 0.0
    %88 = vmatprep.subr.mxu0 0.0
    %89 = vmatpush1.msra.mxu0 0.0
    %90 = vmatprep.subr.mxu0 0.0
    %91 = vmatpush1.msra.mxu0 0.0
    %92 = vmatprep.subr.mxu0 0.0
    %93 = vmatpush1.msra.mxu0 0.0
    %94 = vmatprep.subr.mxu0 0.0
    %95 = vmatpush1.msra.mxu0 0.0
    %96 = vmatprep.subr.mxu0 0.0
    %97 = vmatpush1.msra.mxu0 0.0
    %98 = vmatprep.subr.mxu0 0.0
    %99 = vmatpush1.msra.mxu0 0.0
    %100 = vmatprep.subr.mxu0 0.0
    %101 = vmatpush1.msra.mxu0 0.0
    %102 = vmatprep.subr.mxu0 0.0
    %103 = vmatpush1.msra.mxu0 0.0
    %104 = vmatprep.subr.mxu0 0.0
    %105 = vmatpush1.msra.mxu0 0.0
    %106 = vmatprep.subr.mxu0 0.0
    %107 = vmatpush1.msra.mxu0 0.0
    %108 = vmatprep.subr.mxu0 0.0
    %109 = vmatpush1.msra.mxu0 0.0
    %110 = vmatprep.subr.mxu0 0.0
    %111 = vmatpush1.msra.mxu0 0.0
    %112 = vmatprep.subr.mxu0 0.0
    %113 = vmatpush1.msra.mxu0 0.0
    %114 = vmatprep.subr.mxu0 0.0
    %115 = vmatpush1.msra.mxu0 0.0
    %116 = vmatprep.subr.mxu0 0.0
    %117 = vmatpush1.msra.mxu0 0.0
    %118 = vmatprep.mubr.f32.mxu0 0.0
    %119 = vmatmul.mubr.f32.gmra.mrb[0].mxu0 %v52
    %v120 = vpop.f32.mrb[0].mxu0
    %v121 = vadd.f32 0.0, %v120
    %v122 = vpop.f32.mrb[0].mxu0
    %123 = vdwg.mxu0
    %s124 = sld [smem:[#allocation2 + $0x1]]
    %s125 = smul.u32 %s124, 24
    %s126 = scalar_lea.vmem [#allocation6], %s125
    %v127 = vld [vmem:[%s126] sm:$0xff]
    %v128 = vld [vmem:[%s126 + $0x8] sm:$0xff]
    %v129 = vld [vmem:[%s126 + $0x10] sm:$0xff]
    %v131 = vsel %vm50, %v121, 0
    %133 = vmatprep.subr.mxu0 0.0
    %134 = vmatpush1.msra.mxu0 %v127
    %135 = vmatprep.subr.mxu0 0.0
    %136 = vmatpush1.msra.mxu0 %v128
    %137 = vmatprep.subr.mxu0 0.0
    %138 = vmatpush1.msra.mxu0 %v129
    %139 = vmatprep.subr.mxu0 0.0
    %140 = vmatpush1.msra.mxu0 0.0
    %141 = vmatprep.subr.mxu0 0.0
    %142 = vmatpush1.msra.mxu0 0.0
    %143 = vmatprep.subr.mxu0 0.0
    %144 = vmatpush1.msra.mxu0 0.0
    %145 = vmatprep.subr.mxu0 0.0
    %146 = vmatpush1.msra.mxu0 0.0
    %147 = vmatprep.subr.mxu0 0.0
    %148 = vmatpush1.msra.mxu0 0.0
    %149 = vmatprep.subr.mxu0 0.0
    %150 = vmatpush1.msra.mxu0 0.0
    %151 = vmatprep.subr.mxu0 0.0
    %152 = vmatpush1.msra.mxu0 0.0
    %153 = vmatprep.subr.mxu0 0.0
    %154 = vmatpush1.msra.mxu0 0.0
    %155 = vmatprep.subr.mxu0 0.0
    %156 = vmatpush1.msra.mxu0 0.0
    %157 = vmatprep.subr.mxu0 0.0
    %158 = vmatpush1.msra.mxu0 0.0
    %159 = vmatprep.subr.mxu0 0.0
    %160 = vmatpush1.msra.mxu0 0.0
    %161 = vmatprep.subr.mxu0 0.0
    %162 = vmatpush1.msra.mxu0 0.0
    %163 = vmatprep.subr.mxu0 0.0
    %164 = vmatpush1.msra.mxu0 0.0
    %165 = vmatprep.subr.mxu0 0.0
    %166 = vmatpush1.msra.mxu0 0.0
    %167 = vmatprep.subr.mxu0 0.0
    %168 = vmatpush1.msra.mxu0 0.0
    %169 = vmatprep.subr.mxu0 0.0
    %170 = vmatpush1.msra.mxu0 0.0
    %171 = vmatprep.subr.mxu0 0.0
    %172 = vmatpush1.msra.mxu0 0.0
    %173 = vmatprep.subr.mxu0 0.0
    %174 = vmatpush1.msra.mxu0 0.0
    %175 = vmatprep.subr.mxu0 0.0
    %176 = vmatpush1.msra.mxu0 0.0
    %177 = vmatprep.subr.mxu0 0.0
    %178 = vmatpush1.msra.mxu0 0.0
    %179 = vmatprep.subr.mxu0 0.0
    %180 = vmatpush1.msra.mxu0 0.0
    %181 = vmatprep.subr.mxu0 0.0
    %182 = vmatpush1.msra.mxu0 0.0
    %183 = vmatprep.subr.mxu0 0.0
    %184 = vmatpush1.msra.mxu0 0.0
    %185 = vmatprep.subr.mxu0 0.0
    %186 = vmatpush1.msra.mxu0 0.0
    %187 = vmatprep.subr.mxu0 0.0
    %188 = vmatpush1.msra.mxu0 0.0
    %189 = vmatprep.subr.mxu0 0.0
    %190 = vmatpush1.msra.mxu0 0.0
    %191 = vmatprep.subr.mxu0 0.0
    %192 = vmatpush1.msra.mxu0 0.0
    %193 = vmatprep.subr.mxu0 0.0
    %194 = vmatpush1.msra.mxu0 0.0
    %195 = vmatprep.subr.mxu0 0.0
    %196 = vmatpush1.msra.mxu0 0.0
    %197 = vmatprep.mubr.f32.mxu0 0.0
    %198 = vmatmul.mubr.f32.gmra.mrb[0].mxu0 %v131
    %v199 = vpop.f32.mrb[0].mxu0
    %v200 = vadd.f32 0.0, %v199
    %v201 = vpop.f32.mrb[0].mxu0
    %202 = vdwg.mxu0
    %s203 = sld [smem:[#allocation2 + $0x2]]
    %s204 = smul.u32 %s203, 24
    %s205 = scalar_lea.vmem [#allocation6], %s204
    %v206 = vld [vmem:[%s205] sm:$0xff]
    %v207 = vld [vmem:[%s205 + $0x8] sm:$0xff]
    %v208 = vld [vmem:[%s205 + $0x10] sm:$0xff]
    %v210 = vsel %vm50, %v200, 0
    %212 = vmatprep.subr.mxu0 0.0
    %213 = vmatpush1.msra.mxu0 %v206
    %214 = vmatprep.subr.mxu0 0.0
    %215 = vmatpush1.msra.mxu0 %v207
    %216 = vmatprep.subr.mxu0 0.0
    %217 = vmatpush1.msra.mxu0 %v208
    %218 = vmatprep.subr.mxu0 0.0
    %219 = vmatpush1.msra.mxu0 0.0
    %220 = vmatprep.subr.mxu0 0.0
    %221 = vmatpush1.msra.mxu0 0.0
    %222 = vmatprep.subr.mxu0 0.0
    %223 = vmatpush1.msra.mxu0 0.0
    %224 = vmatprep.subr.mxu0 0.0
    %225 = vmatpush1.msra.mxu0 0.0
    %226 = vmatprep.subr.mxu0 0.0
    %227 = vmatpush1.msra.mxu0 0.0
    %228 = vmatprep.subr.mxu0 0.0
    %229 = vmatpush1.msra.mxu0 0.0
    %230 = vmatprep.subr.mxu0 0.0
    %231 = vmatpush1.msra.mxu0 0.0
    %232 = vmatprep.subr.mxu0 0.0
    %233 = vmatpush1.msra.mxu0 0.0
    %234 = vmatprep.subr.mxu0 0.0
    %235 = vmatpush1.msra.mxu0 0.0
    %236 = vmatprep.subr.mxu0 0.0
    %237 = vmatpush1.msra.mxu0 0.0
    %238 = vmatprep.subr.mxu0 0.0
    %239 = vmatpush1.msra.mxu0 0.0
    %240 = vmatprep.subr.mxu0 0.0
    %241 = vmatpush1.msra.mxu0 0.0
    %242 = vmatprep.subr.mxu0 0.0
    %243 = vmatpush1.msra.mxu0 0.0
    %244 = vmatprep.subr.mxu0 0.0
    %245 = vmatpush1.msra.mxu0 0.0
    %246 = vmatprep.subr.mxu0 0.0
    %247 = vmatpush1.msra.mxu0 0.0
    %248 = vmatprep.subr.mxu0 0.0
    %249 = vmatpush1.msra.mxu0 0.0
    %250 = vmatprep.subr.mxu0 0.0
    %251 = vmatpush1.msra.mxu0 0.0
    %252 = vmatprep.subr.mxu0 0.0
    %253 = vmatpush1.msra.mxu0 0.0
    %254 = vmatprep.subr.mxu0 0.0
    %255 = vmatpush1.msra.mxu0 0.0
    %256 = vmatprep.subr.mxu0 0.0
    %257 = vmatpush1.msra.mxu0 0.0
    %258 = vmatprep.subr.mxu0 0.0
    %259 = vmatpush1.msra.mxu0 0.0
    %260 = vmatprep.subr.mxu0 0.0
    %261 = vmatpush1.msra.mxu0 0.0
    %262 = vmatprep.subr.mxu0 0.0
    %263 = vmatpush1.msra.mxu0 0.0
    %264 = vmatprep.subr.mxu0 0.0
    %265 = vmatpush1.msra.mxu0 0.0
    %266 = vmatprep.subr.mxu0 0.0
    %267 = vmatpush1.msra.mxu0 0.0
    %268 = vmatprep.subr.mxu0 0.0
    %269 = vmatpush1.msra.mxu0 0.0
    %270 = vmatprep.subr.mxu0 0.0
    %271 = vmatpush1.msra.mxu0 0.0
    %272 = vmatprep.subr.mxu0 0.0
    %273 = vmatpush1.msra.mxu0 0.0
    %274 = vmatprep.subr.mxu0 0.0
    %275 = vmatpush1.msra.mxu0 0.0
    %276 = vmatprep.mubr.f32.mxu0 0.0
    %277 = vmatmul.mubr.f32.gmra.mrb[0].mxu0 %v210
    %v278 = vpop.f32.mrb[0].mxu0
    %v279 = vadd.f32 0.0, %v278
    %v280 = vpop.f32.mrb[0].mxu0
    %281 = vdwg.mxu0
    %s282 = sld [smem:[#allocation2 + $0x3]]
    %s283 = smul.u32 %s282, 24
    %s284 = scalar_lea.vmem [#allocation6], %s283
    %v285 = vld [vmem:[%s284] sm:$0xff]
    %v286 = vld [vmem:[%s284 + $0x8] sm:$0xff]
    %v287 = vld [vmem:[%s284 + $0x10] sm:$0xff]
    %v289 = vsel %vm50, %v279, 0
    %291 = vmatprep.subr.mxu0 0.0
    %292 = vmatpush1.msra.mxu0 %v285
    %293 = vmatprep.subr.mxu0 0.0
    %294 = vmatpush1.msra.mxu0 %v286
    %295 = vmatprep.subr.mxu0 0.0
    %296 = vmatpush1.msra.mxu0 %v287
    %297 = vmatprep.subr.mxu0 0.0
    %298 = vmatpush1.msra.mxu0 0.0
    %299 = vmatprep.subr.mxu0 0.0
    %300 = vmatpush1.msra.mxu0 0.0
    %301 = vmatprep.subr.mxu0 0.0
    %302 = vmatpush1.msra.mxu0 0.0
    %303 = vmatprep.subr.mxu0 0.0
    %304 = vmatpush1.msra.mxu0 0.0
    %305 = vmatprep.subr.mxu0 0.0
    %306 = vmatpush1.msra.mxu0 0.0
    %307 = vmatprep.subr.mxu0 0.0
    %308 = vmatpush1.msra.mxu0 0.0
    %309 = vmatprep.subr.mxu0 0.0
    %310 = vmatpush1.msra.mxu0 0.0
    %311 = vmatprep.subr.mxu0 0.0
    %312 = vmatpush1.msra.mxu0 0.0
    %313 = vmatprep.subr.mxu0 0.0
    %314 = vmatpush1.msra.mxu0 0.0
    %315 = vmatprep.subr.mxu0 0.0
    %316 = vmatpush1.msra.mxu0 0.0
    %317 = vmatprep.subr.mxu0 0.0
    %318 = vmatpush1.msra.mxu0 0.0
    %319 = vmatprep.subr.mxu0 0.0
    %320 = vmatpush1.msra.mxu0 0.0
    %321 = vmatprep.subr.mxu0 0.0
    %322 = vmatpush1.msra.mxu0 0.0
    %323 = vmatprep.subr.mxu0 0.0
    %324 = vmatpush1.msra.mxu0 0.0
    %325 = vmatprep.subr.mxu0 0.0
    %326 = vmatpush1.msra.mxu0 0.0
    %327 = vmatprep.subr.mxu0 0.0
    %328 = vmatpush1.msra.mxu0 0.0
    %329 = vmatprep.subr.mxu0 0.0
    %330 = vmatpush1.msra.mxu0 0.0
    %331 = vmatprep.subr.mxu0 0.0
    %332 = vmatpush1.msra.mxu0 0.0
    %333 = vmatprep.subr.mxu0 0.0
    %334 = vmatpush1.msra.mxu0 0.0
    %335 = vmatprep.subr.mxu0 0.0
    %336 = vmatpush1.msra.mxu0 0.0
    %337 = vmatprep.subr.mxu0 0.0
    %338 = vmatpush1.msra.mxu0 0.0
    %339 = vmatprep.subr.mxu0 0.0
    %340 = vmatpush1.msra.mxu0 0.0
    %341 = vmatprep.subr.mxu0 0.0
    %342 = vmatpush1.msra.mxu0 0.0
    %343 = vmatprep.subr.mxu0 0.0
    %344 = vmatpush1.msra.mxu0 0.0
    %345 = vmatprep.subr.mxu0 0.0
    %346 = vmatpush1.msra.mxu0 0.0
    %347 = vmatprep.subr.mxu0 0.0
    %348 = vmatpush1.msra.mxu0 0.0
    %349 = vmatprep.subr.mxu0 0.0
    %350 = vmatpush1.msra.mxu0 0.0
    %351 = vmatprep.subr.mxu0 0.0
    %352 = vmatpush1.msra.mxu0 0.0
    %353 = vmatprep.subr.mxu0 0.0
    %354 = vmatpush1.msra.mxu0 0.0
    %355 = vmatprep.mubr.f32.mxu0 0.0
    %356 = vmatmul.mubr.f32.gmra.mrb[0].mxu0 %v289
    %v357 = vpop.f32.mrb[0].mxu0
    %v358 = vadd.f32 0.0, %v357
    %v359 = vpop.f32.mrb[0].mxu0
    %360 = vdwg.mxu0
    %s361 = sld [smem:[#allocation2 + $0x4]]
    %s362 = smul.u32 %s361, 24
    %s363 = scalar_lea.vmem [#allocation6], %s362
    %v364 = vld [vmem:[%s363] sm:$0xff]
    %v365 = vld [vmem:[%s363 + $0x8] sm:$0xff]
    %v366 = vld [vmem:[%s363 + $0x10] sm:$0xff]
    %v368 = vsel %vm50, %v358, 0
    %370 = vmatprep.subr.mxu0 0.0
    %371 = vmatpush1.msra.mxu0 %v364
    %372 = vmatprep.subr.mxu0 0.0
    %373 = vmatpush1.msra.mxu0 %v365
    %374 = vmatprep.subr.mxu0 0.0
    %375 = vmatpush1.msra.mxu0 %v366
    %376 = vmatprep.subr.mxu0 0.0
    %377 = vmatpush1.msra.mxu0 0.0
    %378 = vmatprep.subr.mxu0 0.0
    %379 = vmatpush1.msra.mxu0 0.0
    %380 = vmatprep.subr.mxu0 0.0
    %381 = vmatpush1.msra.mxu0 0.0
    %382 = vmatprep.subr.mxu0 0.0
    %383 = vmatpush1.msra.mxu0 0.0
    %384 = vmatprep.subr.mxu0 0.0
    %385 = vmatpush1.msra.mxu0 0.0
    %386 = vmatprep.subr.mxu0 0.0
    %387 = vmatpush1.msra.mxu0 0.0
    %388 = vmatprep.subr.mxu0 0.0
    %389 = vmatpush1.msra.mxu0 0.0
    %390 = vmatprep.subr.mxu0 0.0
    %391 = vmatpush1.msra.mxu0 0.0
    %392 = vmatprep.subr.mxu0 0.0
    %393 = vmatpush1.msra.mxu0 0.0
    %394 = vmatprep.subr.mxu0 0.0
    %395 = vmatpush1.msra.mxu0 0.0
    %396 = vmatprep.subr.mxu0 0.0
    %397 = vmatpush1.msra.mxu0 0.0
    %398 = vmatprep.subr.mxu0 0.0
    %399 = vmatpush1.msra.mxu0 0.0
    %400 = vmatprep.subr.mxu0 0.0
    %401 = vmatpush1.msra.mxu0 0.0
    %402 = vmatprep.subr.mxu0 0.0
    %403 = vmatpush1.msra.mxu0 0.0
    %404 = vmatprep.subr.mxu0 0.0
    %405 = vmatpush1.msra.mxu0 0.0
    %406 = vmatprep.subr.mxu0 0.0
    %407 = vmatpush1.msra.mxu0 0.0
    %408 = vmatprep.subr.mxu0 0.0
    %409 = vmatpush1.msra.mxu0 0.0
    %410 = vmatprep.subr.mxu0 0.0
    %411 = vmatpush1.msra.mxu0 0.0
    %412 = vmatprep.subr.mxu0 0.0
    %413 = vmatpush1.msra.mxu0 0.0
    %414 = vmatprep.subr.mxu0 0.0
    %415 = vmatpush1.msra.mxu0 0.0
    %416 = vmatprep.subr.mxu0 0.0
    %417 = vmatpush1.msra.mxu0 0.0
    %418 = vmatprep.subr.mxu0 0.0
    %419 = vmatpush1.msra.mxu0 0.0
    %420 = vmatprep.subr.mxu0 0.0
    %421 = vmatpush1.msra.mxu0 0.0
    %422 = vmatprep.subr.mxu0 0.0
    %423 = vmatpush1.msra.mxu0 0.0
    %424 = vmatprep.subr.mxu0 0.0
    %425 = vmatpush1.msra.mxu0 0.0
    %426 = vmatprep.subr.mxu0 0.0
    %427 = vmatpush1.msra.mxu0 0.0
    %428 = vmatprep.subr.mxu0 0.0
    %429 = vmatpush1.msra.mxu0 0.0
    %430 = vmatprep.subr.mxu0 0.0
    %431 = vmatpush1.msra.mxu0 0.0
    %432 = vmatprep.subr.mxu0 0.0
    %433 = vmatpush1.msra.mxu0 0.0
    %434 = vmatprep.mubr.f32.mxu0 0.0
    %435 = vmatmul.mubr.f32.gmra.mrb[0].mxu0 %v368
    %v436 = vpop.f32.mrb[0].mxu0
    %v437 = vadd.f32 0.0, %v436
    %v438 = vpop.f32.mrb[0].mxu0
    %439 = vdwg.mxu0
    %s440 = sld [smem:[#allocation2 + $0x5]]
    %s441 = smul.u32 %s440, 24
    %s442 = scalar_lea.vmem [#allocation6], %s441
    %v443 = vld [vmem:[%s442] sm:$0xff]
    %v444 = vld [vmem:[%s442 + $0x8] sm:$0xff]
    %v445 = vld [vmem:[%s442 + $0x10] sm:$0xff]
    %v447 = vsel %vm50, %v437, 0
    %449 = vmatprep.subr.mxu0 0.0
    %450 = vmatpush1.msra.mxu0 %v443
    %451 = vmatprep.subr.mxu0 0.0
    %452 = vmatpush1.msra.mxu0 %v444
    %453 = vmatprep.subr.mxu0 0.0
    %454 = vmatpush1.msra.mxu0 %v445
    %455 = vmatprep.subr.mxu0 0.0
    %456 = vmatpush1.msra.mxu0 0.0
    %457 = vmatprep.subr.mxu0 0.0
    %458 = vmatpush1.msra.mxu0 0.0
    %459 = vmatprep.subr.mxu0 0.0
    %460 = vmatpush1.msra.mxu0 0.0
    %461 = vmatprep.subr.mxu0 0.0
    %462 = vmatpush1.msra.mxu0 0.0
    %463 = vmatprep.subr.mxu0 0.0
    %464 = vmatpush1.msra.mxu0 0.0
    %465 = vmatprep.subr.mxu0 0.0
    %466 = vmatpush1.msra.mxu0 0.0
    %467 = vmatprep.subr.mxu0 0.0
    %468 = vmatpush1.msra.mxu0 0.0
    %469 = vmatprep.subr.mxu0 0.0
    %470 = vmatpush1.msra.mxu0 0.0
    %471 = vmatprep.subr.mxu0 0.0
    %472 = vmatpush1.msra.mxu0 0.0
    %473 = vmatprep.subr.mxu0 0.0
    %474 = vmatpush1.msra.mxu0 0.0
    %475 = vmatprep.subr.mxu0 0.0
    %476 = vmatpush1.msra.mxu0 0.0
    %477 = vmatprep.subr.mxu0 0.0
    %478 = vmatpush1.msra.mxu0 0.0
    %479 = vmatprep.subr.mxu0 0.0
    %480 = vmatpush1.msra.mxu0 0.0
    %481 = vmatprep.subr.mxu0 0.0
    %482 = vmatpush1.msra.mxu0 0.0
    %483 = vmatprep.subr.mxu0 0.0
    %484 = vmatpush1.msra.mxu0 0.0
    %485 = vmatprep.subr.mxu0 0.0
    %486 = vmatpush1.msra.mxu0 0.0
    %487 = vmatprep.subr.mxu0 0.0
    %488 = vmatpush1.msra.mxu0 0.0
    %489 = vmatprep.subr.mxu0 0.0
    %490 = vmatpush1.msra.mxu0 0.0
    %491 = vmatprep.subr.mxu0 0.0
    %492 = vmatpush1.msra.mxu0 0.0
    %493 = vmatprep.subr.mxu0 0.0
    %494 = vmatpush1.msra.mxu0 0.0
    %495 = vmatprep.subr.mxu0 0.0
    %496 = vmatpush1.msra.mxu0 0.0
    %497 = vmatprep.subr.mxu0 0.0
    %498 = vmatpush1.msra.mxu0 0.0
    %499 = vmatprep.subr.mxu0 0.0
    %500 = vmatpush1.msra.mxu0 0.0
    %501 = vmatprep.subr.mxu0 0.0
    %502 = vmatpush1.msra.mxu0 0.0
    %503 = vmatprep.subr.mxu0 0.0
    %504 = vmatpush1.msra.mxu0 0.0
    %505 = vmatprep.subr.mxu0 0.0
    %506 = vmatpush1.msra.mxu0 0.0
    %507 = vmatprep.subr.mxu0 0.0
    %508 = vmatpush1.msra.mxu0 0.0
    %509 = vmatprep.subr.mxu0 0.0
    %510 = vmatpush1.msra.mxu0 0.0
    %511 = vmatprep.subr.mxu0 0.0
    %512 = vmatpush1.msra.mxu0 0.0
    %513 = vmatprep.mubr.f32.mxu0 0.0
    %514 = vmatmul.mubr.f32.gmra.mrb[0].mxu0 %v447
    %v515 = vpop.f32.mrb[0].mxu0
    %v516 = vadd.f32 0.0, %v515
    %v517 = vpop.f32.mrb[0].mxu0
    %518 = vdwg.mxu0
    %s519 = sld [smem:[#allocation2 + $0x6]]
    %s520 = smul.u32 %s519, 24
    %s521 = scalar_lea.vmem [#allocation6], %s520
    %v522 = vld [vmem:[%s521] sm:$0xff]
    %v523 = vld [vmem:[%s521 + $0x8] sm:$0xff]
    %v524 = vld [vmem:[%s521 + $0x10] sm:$0xff]
    %v526 = vsel %vm50, %v516, 0
    %528 = vmatprep.subr.mxu0 0.0
    %529 = vmatpush1.msra.mxu0 %v522
    %530 = vmatprep.subr.mxu0 0.0
    %531 = vmatpush1.msra.mxu0 %v523
    %532 = vmatprep.subr.mxu0 0.0
    %533 = vmatpush1.msra.mxu0 %v524
    %534 = vmatprep.subr.mxu0 0.0
    %535 = vmatpush1.msra.mxu0 0.0
    %536 = vmatprep.subr.mxu0 0.0
    %537 = vmatpush1.msra.mxu0 0.0
    %538 = vmatprep.subr.mxu0 0.0
    %539 = vmatpush1.msra.mxu0 0.0
    %540 = vmatprep.subr.mxu0 0.0
    %541 = vmatpush1.msra.mxu0 0.0
    %542 = vmatprep.subr.mxu0 0.0
    %543 = vmatpush1.msra.mxu0 0.0
    %544 = vmatprep.subr.mxu0 0.0
    %545 = vmatpush1.msra.mxu0 0.0
    %546 = vmatprep.subr.mxu0 0.0
    %547 = vmatpush1.msra.mxu0 0.0
    %548 = vmatprep.subr.mxu0 0.0
    %549 = vmatpush1.msra.mxu0 0.0
    %550 = vmatprep.subr.mxu0 0.0
    %551 = vmatpush1.msra.mxu0 0.0
    %552 = vmatprep.subr.mxu0 0.0
    %553 = vmatpush1.msra.mxu0 0.0
    %554 = vmatprep.subr.mxu0 0.0
    %555 = vmatpush1.msra.mxu0 0.0
    %556 = vmatprep.subr.mxu0 0.0
    %557 = vmatpush1.msra.mxu0 0.0
    %558 = vmatprep.subr.mxu0 0.0
    %559 = vmatpush1.msra.mxu0 0.0
    %560 = vmatprep.subr.mxu0 0.0
    %561 = vmatpush1.msra.mxu0 0.0
    %562 = vmatprep.subr.mxu0 0.0
    %563 = vmatpush1.msra.mxu0 0.0
    %564 = vmatprep.subr.mxu0 0.0
    %565 = vmatpush1.msra.mxu0 0.0
    %566 = vmatprep.subr.mxu0 0.0
    %567 = vmatpush1.msra.mxu0 0.0
    %568 = vmatprep.subr.mxu0 0.0
    %569 = vmatpush1.msra.mxu0 0.0
    %570 = vmatprep.subr.mxu0 0.0
    %571 = vmatpush1.msra.mxu0 0.0
    %572 = vmatprep.subr.mxu0 0.0
    %573 = vmatpush1.msra.mxu0 0.0
    %574 = vmatprep.subr.mxu0 0.0
    %575 = vmatpush1.msra.mxu0 0.0
    %576 = vmatprep.subr.mxu0 0.0
    %577 = vmatpush1.msra.mxu0 0.0
    %578 = vmatprep.subr.mxu0 0.0
    %579 = vmatpush1.msra.mxu0 0.0
    %580 = vmatprep.subr.mxu0 0.0
    %581 = vmatpush1.msra.mxu0 0.0
    %582 = vmatprep.subr.mxu0 0.0
    %583 = vmatpush1.msra.mxu0 0.0
    %584 = vmatprep.subr.mxu0 0.0
    %585 = vmatpush1.msra.mxu0 0.0
    %586 = vmatprep.subr.mxu0 0.0
    %587 = vmatpush1.msra.mxu0 0.0
    %588 = vmatprep.subr.mxu0 0.0
    %589 = vmatpush1.msra.mxu0 0.0
    %590 = vmatprep.subr.mxu0 0.0
    %591 = vmatpush1.msra.mxu0 0.0
    %592 = vmatprep.mubr.f32.mxu0 0.0
    %593 = vmatmul.mubr.f32.gmra.mrb[0].mxu0 %v526
    %v594 = vpop.f32.mrb[0].mxu0
    %v595 = vadd.f32 0.0, %v594
    %v596 = vpop.f32.mrb[0].mxu0
    %597 = vdwg.mxu0
    %s598 = sld [smem:[#allocation2 + $0x7]]
    %s599 = smul.u32 %s598, 24
    %s600 = scalar_lea.vmem [#allocation6], %s599
    %v601 = vld [vmem:[%s600] sm:$0xff]
    %v602 = vld [vmem:[%s600 + $0x8] sm:$0xff]
    %v603 = vld [vmem:[%s600 + $0x10] sm:$0xff]
    %v605 = vsel %vm50, %v595, 0
    %607 = vmatprep.subr.mxu0 0.0
    %608 = vmatpush1.msra.mxu0 %v601
    %609 = vmatprep.subr.mxu0 0.0
    %610 = vmatpush1.msra.mxu0 %v602
    %611 = vmatprep.subr.mxu0 0.0
    %612 = vmatpush1.msra.mxu0 %v603
    %613 = vmatprep.subr.mxu0 0.0
    %614 = vmatpush1.msra.mxu0 0.0
    %615 = vmatprep.subr.mxu0 0.0
    %616 = vmatpush1.msra.mxu0 0.0
    %617 = vmatprep.subr.mxu0 0.0
    %618 = vmatpush1.msra.mxu0 0.0
    %619 = vmatprep.subr.mxu0 0.0
    %620 = vmatpush1.msra.mxu0 0.0
    %621 = vmatprep.subr.mxu0 0.0
    %622 = vmatpush1.msra.mxu0 0.0
    %623 = vmatprep.subr.mxu0 0.0
    %624 = vmatpush1.msra.mxu0 0.0
    %625 = vmatprep.subr.mxu0 0.0
    %626 = vmatpush1.msra.mxu0 0.0
    %627 = vmatprep.subr.mxu0 0.0
    %628 = vmatpush1.msra.mxu0 0.0
    %629 = vmatprep.subr.mxu0 0.0
    %630 = vmatpush1.msra.mxu0 0.0
    %631 = vmatprep.subr.mxu0 0.0
    %632 = vmatpush1.msra.mxu0 0.0
    %633 = vmatprep.subr.mxu0 0.0
    %634 = vmatpush1.msra.mxu0 0.0
    %635 = vmatprep.subr.mxu0 0.0
    %636 = vmatpush1.msra.mxu0 0.0
    %637 = vmatprep.subr.mxu0 0.0
    %638 = vmatpush1.msra.mxu0 0.0
    %639 = vmatprep.subr.mxu0 0.0
    %640 = vmatpush1.msra.mxu0 0.0
    %641 = vmatprep.subr.mxu0 0.0
    %642 = vmatpush1.msra.mxu0 0.0
    %643 = vmatprep.subr.mxu0 0.0
    %644 = vmatpush1.msra.mxu0 0.0
    %645 = vmatprep.subr.mxu0 0.0
    %646 = vmatpush1.msra.mxu0 0.0
    %647 = vmatprep.subr.mxu0 0.0
    %648 = vmatpush1.msra.mxu0 0.0
    %649 = vmatprep.subr.mxu0 0.0
    %650 = vmatpush1.msra.mxu0 0.0
    %651 = vmatprep.subr.mxu0 0.0
    %652 = vmatpush1.msra.mxu0 0.0
    %653 = vmatprep.subr.mxu0 0.0
    %654 = vmatpush1.msra.mxu0 0.0
    %655 = vmatprep.subr.mxu0 0.0
    %656 = vmatpush1.msra.mxu0 0.0
    %657 = vmatprep.subr.mxu0 0.0
    %658 = vmatpush1.msra.mxu0 0.0
    %659 = vmatprep.subr.mxu0 0.0
    %660 = vmatpush1.msra.mxu0 0.0
    %661 = vmatprep.subr.mxu0 0.0
    %662 = vmatpush1.msra.mxu0 0.0
    %663 = vmatprep.subr.mxu0 0.0
    %664 = vmatpush1.msra.mxu0 0.0
    %665 = vmatprep.subr.mxu0 0.0
    %666 = vmatpush1.msra.mxu0 0.0
    %667 = vmatprep.subr.mxu0 0.0
    %668 = vmatpush1.msra.mxu0 0.0
    %669 = vmatprep.subr.mxu0 0.0
    %670 = vmatpush1.msra.mxu0 0.0
    %671 = vmatprep.mubr.f32.mxu0 0.0
    %672 = vmatmul.mubr.f32.gmra.mrb[0].mxu0 %v605
    %v673 = vpop.f32.mrb[0].mxu0
    %v674 = vadd.f32 0.0, %v673
    %v675 = vpop.f32.mrb[0].mxu0
    %676 = vdwg.mxu0
    %v677 = vld [vmem:[%s3] sm:$0x1]
    %v678 = vmul.f32 %v674, %v677
    %vm679 = vcmask 188416
    %v680 = vsel %vm679, %v678, 0.0
    %681 = vadd.xlane.f32.xlu0 %v680
    %v682 = vpop.xlane.xlu0 %681
    %v683 = vmul.f32 %v682, 1.442695
    %v684 = vpow.pop %v683
    %v685 = vsub.f32 1.0, %v684
    %vm686 = vcmask 0
    %687 = vst.msk [vmem:[#allocation7] sm:$0x1] %vm686, %v685
    // Predicated region
    $region26: #{tpu_custom_call.1} parent=1 // pred_check
      _
    $region27: #{tpu_custom_call.1} parent=1 // pred_check_branch
      %689 = sbr.rel (0) target = $region29
    $region28: #{tpu_custom_call.1} parent=1 // pred_region
      %s691 = ssub.s32 16, 16
      %692 = vsyncadd [#allocation4], %s691
      %s694 = sshll.u32 [#allocation7], 4
      %s695 = int_to_ptr.vmem [resolvable:$true] %s694
      %697 = dma.vmem_to_hbm [thread:$0]  %s695, 16, %s4, [#allocation4]
    $region29: #{tpu_custom_call.1} parent=1 // pred_fallthru
      _
    // Predicated region
    $region30: #{tpu_custom_call.1} parent=1 // pred_check
      _
    $region31: #{tpu_custom_call.1} parent=1 // pred_check_branch
      %699 = sbr.rel (0) target = $region33
    $region32: #{tpu_custom_call.1} parent=1 // pred_region
      %700 = dma.done [#allocation4], 16
    $region33: #{tpu_custom_call.1} parent=1 // pred_fallthru
      _
    %701 = vsyncpa [#allocation3], 1
    %702 = vsyncpa [#allocation4], 1
    %703 = vsyncpa [#allocation5], 1

</llo_original>
